<compile_context>
chip_gen: v7x
topology: tpu7x:2x2x1
jax: 0.10.0
libtpu: 0.0.40
codegen_flags: <defaults>
</compile_context>

<pallas_src>
import numpy as np

import jax
import jax.numpy as jnp
from jax.experimental import pallas as pl
from jax.experimental.pallas import tpu as pltpu

NUM_EMBEDDINGS = 50  # nn.Embedding(50, num_pos_feats)
LANE = 128


def _round_up(n, m):
    return (n + m - 1) // m * m


def pos_embed_slab_kernel(lhs_ref, sel_ref, out_ref):
    """Single fused block-diagonal matmul producing the lane-dense slab.

    lhs_ref: (2F, W+H) f32  = [[col[:W].T, 0], [0, row[:H].T]]
    sel_ref: (W+H, HWp) f32 constant 0/1 selector
    out_ref: (2F, HWp) with
        out[f,     i*W + j] = col_embed[j, f]
        out[F + f, i*W + j] = row_embed[i, f]
    One MXU sequence, one full-width store.
    """
    out_ref[...] = jnp.dot(
        lhs_ref[...], sel_ref[...],
        preferred_element_type=jnp.float32,
    ).astype(out_ref.dtype)


def _build_selector(H, W, hw_pad):
    """0/1 selector of shape (W+H, hw_pad), built at trace time with NumPy.

    sel[j,     i*W + j] = 1   (column half: picks col_embed[j])
    sel[W + i, i*W + j] = 1   (row half:    picks row_embed[i])
    Padded columns (k >= H*W) are all-zero; the wrapper slices them off.
    """
    k = np.arange(hw_pad)
    valid = k < H * W
    sel_col = ((k[None, :] % W) == np.arange(W)[:, None]) & valid[None, :]
    sel_row = ((k[None, :] // W) == np.arange(H)[:, None]) & valid[None, :]
    return np.concatenate([sel_col, sel_row], axis=0).astype(np.float32)


def position_embedding_learned(x, col_embed, row_embed):
    """x: (B, C, H, W). col_embed/row_embed: (50, F). Returns (B, 2F, H, W)."""
    B, _, H, W = x.shape
    F = col_embed.shape[1]
    assert H <= NUM_EMBEDDINGS and W <= NUM_EMBEDDINGS

    HW = H * W
    hw_pad = _round_up(HW, LANE)

    # Layout-only parameter plumbing (no FLOPs), hoisted out of the kernel:
    #   lhs = [[col[:W].T, 0], [0, row[:H].T]]  -> (2F, W+H)
    col_t = jnp.transpose(col_embed[:W]).astype(jnp.float32)   # (F, W)
    row_t = jnp.transpose(row_embed[:H]).astype(jnp.float32)   # (F, H)
    lhs = jnp.concatenate(
        [jnp.pad(col_t, ((0, 0), (0, H))),
         jnp.pad(row_t, ((0, 0), (W, 0)))], axis=0)            # (2F, W+H)

    sel = jnp.asarray(_build_selector(H, W, hw_pad))           # (W+H, hw_pad)

    out_dtype = col_embed.dtype
    itemsize = jnp.zeros((), out_dtype).dtype.itemsize
    cost = pl.CostEstimate(
        flops=2 * (2 * F) * (W + H) * hw_pad,
        transcendentals=0,
        bytes_accessed=(lhs.size + sel.size) * 4 + (2 * F) * hw_pad * itemsize,
    )

    slab = pl.pallas_call(
        pos_embed_slab_kernel,
        out_shape=jax.ShapeDtypeStruct((2 * F, hw_pad), out_dtype),
        in_specs=[pl.BlockSpec(memory_space=pltpu.MemorySpace.VMEM),
                  pl.BlockSpec(memory_space=pltpu.MemorySpace.VMEM)],
        out_specs=pl.BlockSpec(memory_space=pltpu.MemorySpace.VMEM),
        cost_estimate=cost,
    )(lhs, sel)

    # Drop the lane padding (no-op when HW is a 128 multiple), free reshape to
    # NCHW spatial dims, then a lazy broadcast over the batch dimension (the
    # output depends only on x's shape, not its values — same as PyTorch).
    pos = slab[:, :HW].reshape(2 * F, H, W)
    return jnp.broadcast_to(pos[None], (B, 2 * F, H, W))


def reference(x, col_embed, row_embed):
    B, _, H, W = x.shape
    F = col_embed.shape[1]
    x_emb = col_embed[:W]                      # (W, F)
    y_emb = row_embed[:H]                      # (H, F)
    pos = jnp.concatenate(
        [jnp.broadcast_to(x_emb[None, :, :], (H, W, F)),
         jnp.broadcast_to(y_emb[:, None, :], (H, W, F))], axis=-1)
    pos = jnp.transpose(pos, (2, 0, 1))        # (2F, H, W)
    return jnp.broadcast_to(pos[None], (B, 2 * F, H, W))


if __name__ == "__main__":
    key = jax.random.PRNGKey(0)
    k_row, k_col, k_x = jax.random.split(key, 3)

    num_pos_feats = 32
    B, C, H, W = 2, 4, 16, 16

    # nn.init.uniform_ -> U[0, 1)
    row_embed = jax.random.uniform(k_row, (NUM_EMBEDDINGS, num_pos_feats),
                                   dtype=jnp.float32)
    col_embed = jax.random.uniform(k_col, (NUM_EMBEDDINGS, num_pos_feats),
                                   dtype=jnp.float32)
    x = jax.random.normal(k_x, (B, C, H, W), dtype=jnp.float32)

    fwd = jax.jit(position_embedding_learned)
    pos = jax.block_until_ready(fwd(x, col_embed, row_embed))

    ref = reference(x, col_embed, row_embed)
    assert pos.shape == (B, 2 * num_pos_feats, H, W)
    assert jnp.allclose(pos, ref), "mismatch vs reference"

    print("KERNEL_OK")
</pallas_src>

<mosaic_0001>
module attributes {stable_mosaic.version = 11 : i64} {
  func.func @pos_embed_slab_kernel(%arg0: memref<64x32xf32, #tpu.memory_space<vmem>>, %arg1: memref<32x256xf32, #tpu.memory_space<vmem>>, %arg2: memref<64x256xf32, #tpu.memory_space<vmem>>) attributes {dimension_semantics = [], scalar_prefetch = 0 : i64, scratch_operands = 0 : i64, tpu.core_type = #tpu.core_type<tc>} {
    %c0 = arith.constant 0 : index
    %c0_0 = arith.constant 0 : index
    %0 = vector.load %arg0[%c0, %c0_0] : memref<64x32xf32, #tpu.memory_space<vmem>>, vector<64x32xf32>
    %c0_1 = arith.constant 0 : index
    %c0_2 = arith.constant 0 : index
    %1 = vector.load %arg1[%c0_1, %c0_2] : memref<32x256xf32, #tpu.memory_space<vmem>>, vector<32x256xf32>
    %cst = arith.constant dense<0.000000e+00> : vector<64x256xf32>
    %2 = tpu.matmul %0, %1, %cst {dimension_numbers = #tpu.dot_dimension_numbers<[1], [0], [0], [1], [0, 0, 1, 1], [], []>} : vector<64x32xf32>, vector<32x256xf32>, vector<64x256xf32> -> vector<64x256xf32>
    %c0_3 = arith.constant 0 : index
    %c0_4 = arith.constant 0 : index
    %3 = vector.load %arg2[%c0_3, %c0_4] : memref<64x256xf32, #tpu.memory_space<vmem>>, vector<64x256xf32>
    tpu.vector_store %arg2[%c0_3, %c0_4], %2 {strides = array<i32>} : memref<64x256xf32, #tpu.memory_space<vmem>>, vector<64x256xf32>,
    return
  }
}

</mosaic_0001>

<llo_original>
// kernel: position_embedding_learned.1
$region0: #{position_embedding_learned.1}
  #allocation0 [shape = 'u32[]', space=smem, size = 0x4, offset = 0x4, fixed_abs, tag = 'smem constant byte address 0x4 - core index']
  #allocation1 [shape = 'u32[144,128]{1,0:T(1,128)}', space=vmem, size = 0x12000, scoped, tag = 'internal scratch']
  %s0 = inlined_call_operand.vmem [shape: f32[64,32], index: 0, kind: input, shape index: {}]
  %s1 = inlined_call_operand.vmem [shape: f32[32,256], index: 1, kind: input, shape index: {}]
  %s2 = inlined_call_operand.vmem [shape: f32[64,256], index: 2, kind: output, shape index: {}]
  %s3 = sld [smem:[#allocation0]]
  $region18: #{position_embedding_learned.1} parent=0
    _
  %s5 = ssub.s32 1, %s3
  %s6 = scalar_select 0, %s5, %s3
  // Predicated region
  $region2: #{position_embedding_learned.1} parent=0 // pred_check
    _
  $region3: #{position_embedding_learned.1} parent=0 // pred_check_branch
    %8 = sbr.rel (0) target = $region5
  $region4: #{position_embedding_learned.1} parent=0 // pred_region
    _
  $region5: #{position_embedding_learned.1} parent=0 // pred_fallthru
    _
  // Predicated region
  $region6: #{position_embedding_learned.1} parent=0 // pred_check
    _
  $region7: #{position_embedding_learned.1} parent=0 // pred_check_branch
    %10 = sbr.rel (0) target = $region9
  $region8: #{position_embedding_learned.1} parent=0 // pred_region
    _
  $region9: #{position_embedding_learned.1} parent=0 // pred_fallthru
    _
  %v11 = vld [vmem:[%s0] sm:$0xff]
  %v12 = vld [vmem:[%s0 + $0x8] sm:$0xff]
  %v13 = vld [vmem:[%s0 + $0x10] sm:$0xff]
  %v14 = vld [vmem:[%s0 + $0x18] sm:$0xff]
  %v15 = vld [vmem:[%s0 + $0x20] sm:$0xff]
  %v16 = vld [vmem:[%s0 + $0x28] sm:$0xff]
  %v17 = vld [vmem:[%s0 + $0x30] sm:$0xff]
  %v18 = vld [vmem:[%s0 + $0x38] sm:$0xff]
  %v19 = vld [vmem:[%s1] sm:$0xff]
  %v20 = vld [vmem:[%s1 + $0x8] sm:$0xff]
  %v21 = vld [vmem:[%s1 + $0x10] sm:$0xff]
  %v22 = vld [vmem:[%s1 + $0x18] sm:$0xff]
  %v23 = vld [vmem:[%s1 + $0x20] sm:$0xff]
  %v24 = vld [vmem:[%s1 + $0x28] sm:$0xff]
  %v25 = vld [vmem:[%s1 + $0x30] sm:$0xff]
  %v26 = vld [vmem:[%s1 + $0x38] sm:$0xff]
  %vm27 = vcmask 261120
  %v29 = vsel %vm27, %v11, 0
  %v32 = vsel %vm27, %v12, 0
  %v35 = vsel %vm27, %v13, 0
  %v38 = vsel %vm27, %v14, 0
  %v41 = vsel %vm27, %v15, 0
  %v44 = vsel %vm27, %v16, 0
  %v47 = vsel %vm27, %v17, 0
  %v50 = vsel %vm27, %v18, 0
  %52 = vmatprep.subr.mxu0 %v20
  %53 = vmatpush1.msra.mxu0 %v19
  %54 = vmatprep.subr.mxu0 %v22
  %55 = vmatpush1.msra.mxu0 %v21
  %56 = vmatprep.subr.mxu0 %v24
  %57 = vmatpush1.msra.mxu0 %v23
  %58 = vmatprep.subr.mxu0 %v26
  %59 = vmatpush1.msra.mxu0 %v25
  %60 = vmatprep.subr.mxu0 0.0
  %61 = vmatpush1.msra.mxu0 0.0
  %62 = vmatprep.subr.mxu0 0.0
  %63 = vmatpush1.msra.mxu0 0.0
  %64 = vmatprep.subr.mxu0 0.0
  %65 = vmatpush1.msra.mxu0 0.0
  %66 = vmatprep.subr.mxu0 0.0
  %67 = vmatpush1.msra.mxu0 0.0
  %68 = vmatprep.subr.mxu0 0.0
  %69 = vmatpush1.msra.mxu0 0.0
  %70 = vmatprep.subr.mxu0 0.0
  %71 = vmatpush1.msra.mxu0 0.0
  %72 = vmatprep.subr.mxu0 0.0
  %73 = vmatpush1.msra.mxu0 0.0
  %74 = vmatprep.subr.mxu0 0.0
  %75 = vmatpush1.msra.mxu0 0.0
  %76 = vmatprep.subr.mxu0 0.0
  %77 = vmatpush1.msra.mxu0 0.0
  %78 = vmatprep.subr.mxu0 0.0
  %79 = vmatpush1.msra.mxu0 0.0
  %80 = vmatprep.subr.mxu0 0.0
  %81 = vmatpush1.msra.mxu0 0.0
  %82 = vmatprep.subr.mxu0 0.0
  %83 = vmatpush1.msra.mxu0 0.0
  %84 = vmatprep.subr.mxu0 0.0
  %85 = vmatpush1.msra.mxu0 0.0
  %86 = vmatprep.subr.mxu0 0.0
  %87 = vmatpush1.msra.mxu0 0.0
  %88 = vmatprep.subr.mxu0 0.0
  %89 = vmatpush1.msra.mxu0 0.0
  %90 = vmatprep.subr.mxu0 0.0
  %91 = vmatpush1.msra.mxu0 0.0
  %92 = vmatprep.subr.mxu0 0.0
  %93 = vmatpush1.msra.mxu0 0.0
  %94 = vmatprep.subr.mxu0 0.0
  %95 = vmatpush1.msra.mxu0 0.0
  %96 = vmatprep.subr.mxu0 0.0
  %97 = vmatpush1.msra.mxu0 0.0
  %98 = vmatprep.subr.mxu0 0.0
  %99 = vmatpush1.msra.mxu0 0.0
  %100 = vmatprep.subr.mxu0 0.0
  %101 = vmatpush1.msra.mxu0 0.0
  %102 = vmatprep.subr.mxu0 0.0
  %103 = vmatpush1.msra.mxu0 0.0
  %104 = vmatprep.subr.mxu0 0.0
  %105 = vmatpush1.msra.mxu0 0.0
  %106 = vmatprep.subr.mxu0 0.0
  %107 = vmatpush1.msra.mxu0 0.0
  %108 = vmatprep.subr.mxu0 0.0
  %109 = vmatpush1.msra.mxu0 0.0
  %110 = vmatprep.subr.mxu0 0.0
  %111 = vmatpush1.msra.mxu0 0.0
  %112 = vmatprep.subr.mxu0 0.0
  %113 = vmatpush1.msra.mxu0 0.0
  %114 = vmatprep.subr.mxu0 0.0
  %115 = vmatpush1.msra.mxu0 0.0
  %116 = vmatprep.mubr.f32.mxu0 0.0
  %117 = vmatmul.mubr.f32.gmra.mrb[0].mxu0 %v29
  %v118 = vpop.f32.mrb[0].mxu0
  %v119 = vadd.f32 0.0, %v118
  %v120 = vpop.f32.mrb[0].mxu0
  %v121 = vadd.f32 0.0, %v120
  %122 = vmatprep.mubr.f32.mxu0 0.0
  %123 = vmatmul.mubr.f32.gmra.mrb[0].mxu0 %v32
  %v124 = vpop.f32.mrb[0].mxu0
  %v125 = vadd.f32 0.0, %v124
  %v126 = vpop.f32.mrb[0].mxu0
  %v127 = vadd.f32 0.0, %v126
  %128 = vmatprep.mubr.f32.mxu0 0.0
  %129 = vmatmul.mubr.f32.gmra.mrb[0].mxu0 %v35
  %v130 = vpop.f32.mrb[0].mxu0
  %v131 = vadd.f32 0.0, %v130
  %v132 = vpop.f32.mrb[0].mxu0
  %v133 = vadd.f32 0.0, %v132
  %134 = vmatprep.mubr.f32.mxu0 0.0
  %135 = vmatmul.mubr.f32.gmra.mrb[0].mxu0 %v38
  %v136 = vpop.f32.mrb[0].mxu0
  %v137 = vadd.f32 0.0, %v136
  %v138 = vpop.f32.mrb[0].mxu0
  %v139 = vadd.f32 0.0, %v138
  %140 = vmatprep.mubr.f32.mxu0 0.0
  %141 = vmatmul.mubr.f32.gmra.mrb[0].mxu0 %v41
  %v142 = vpop.f32.mrb[0].mxu0
  %v143 = vadd.f32 0.0, %v142
  %v144 = vpop.f32.mrb[0].mxu0
  %v145 = vadd.f32 0.0, %v144
  %146 = vmatprep.mubr.f32.mxu0 0.0
  %147 = vmatmul.mubr.f32.gmra.mrb[0].mxu0 %v44
  %v148 = vpop.f32.mrb[0].mxu0
  %v149 = vadd.f32 0.0, %v148
  %v150 = vpop.f32.mrb[0].mxu0
  %v151 = vadd.f32 0.0, %v150
  %152 = vmatprep.mubr.f32.mxu0 0.0
  %153 = vmatmul.mubr.f32.gmra.mrb[0].mxu0 %v47
  %v154 = vpop.f32.mrb[0].mxu0
  %v155 = vadd.f32 0.0, %v154
  %v156 = vpop.f32.mrb[0].mxu0
  %v157 = vadd.f32 0.0, %v156
  %158 = vmatprep.mubr.f32.mxu0 0.0
  %159 = vmatmul.mubr.f32.gmra.mrb[0].mxu0 %v50
  %v160 = vpop.f32.mrb[0].mxu0
  %v161 = vadd.f32 0.0, %v160
  %v162 = vpop.f32.mrb[0].mxu0
  %v163 = vadd.f32 0.0, %v162
  %164 = vdwg.mxu0
  %165 = vst [vmem:[%s2] sm:$0xff] %v119
  %166 = vst [vmem:[%s2 + $0x8] sm:$0xff] %v121
  %167 = vst [vmem:[%s2 + $0x10] sm:$0xff] %v125
  %168 = vst [vmem:[%s2 + $0x18] sm:$0xff] %v127
  %169 = vst [vmem:[%s2 + $0x20] sm:$0xff] %v131
  %170 = vst [vmem:[%s2 + $0x28] sm:$0xff] %v133
  %171 = vst [vmem:[%s2 + $0x30] sm:$0xff] %v137
  %172 = vst [vmem:[%s2 + $0x38] sm:$0xff] %v139
  %173 = vst [vmem:[%s2 + $0x40] sm:$0xff] %v143
  %174 = vst [vmem:[%s2 + $0x48] sm:$0xff] %v145
  %175 = vst [vmem:[%s2 + $0x50] sm:$0xff] %v149
  %176 = vst [vmem:[%s2 + $0x58] sm:$0xff] %v151
  %177 = vst [vmem:[%s2 + $0x60] sm:$0xff] %v155
  %178 = vst [vmem:[%s2 + $0x68] sm:$0xff] %v157
  %179 = vst [vmem:[%s2 + $0x70] sm:$0xff] %v161
  %180 = vst [vmem:[%s2 + $0x78] sm:$0xff] %v163
  // Predicated region
  $region10: #{position_embedding_learned.1} parent=0 // pred_check
    _
  $region11: #{position_embedding_learned.1} parent=0 // pred_check_branch
    %182 = sbr.rel (0) target = $region13
  $region12: #{position_embedding_learned.1} parent=0 // pred_region
    _
  $region13: #{position_embedding_learned.1} parent=0 // pred_fallthru
    _
  // Predicated region
  $region14: #{position_embedding_learned.1} parent=0 // pred_check
    _
  $region15: #{position_embedding_learned.1} parent=0 // pred_check_branch
    %184 = sbr.rel (0) target = $region17
  $region16: #{position_embedding_learned.1} parent=0 // pred_region
    _
  $region17: #{position_embedding_learned.1} parent=0 // pred_fallthru
    _

</llo_original>
